<compile_context>
chip_gen: v7x
topology: tpu7x:2x2x1
jax: 0.10.0
libtpu: 0.0.40
codegen_flags: <defaults>
</compile_context>

<pallas_src>
from functools import partial

import jax
import jax.numpy as jnp
import numpy as np
from jax.experimental import pallas as pl
from jax.experimental.pallas import tpu as pltpu


def _pad_lanes(x, left, right):
    """Zero-pad a 2-D (C, P) value along the lane (last) axis."""
    c = x.shape[0]
    parts = []
    if left:
        parts.append(jnp.zeros((c, left), x.dtype))
    parts.append(x)
    if right:
        parts.append(jnp.zeros((c, right), x.dtype))
    if len(parts) == 1:
        return x
    return jnp.concatenate(parts, axis=1)


def _dilated_conv1d(x, w, K, dil, pad_l, pad_r, W):
    """'same' dilated conv over H, with H*W flattened into lanes (p = h*W + w).

    x: (Cin, H*W) float32, w: (Cout, K*Cin) bfloat16.  Returns (Cout, H*W) float32.
    One MXU matmul: taps are concatenated into the contraction dim (im2col).
    """
    Cin, HW = x.shape
    x16 = x.astype(jnp.bfloat16)
    xp = _pad_lanes(x16, pad_l * W, pad_r * W)                    # (Cin, (H+total)*W)
    taps = [xp[:, t * dil * W: t * dil * W + HW] for t in range(K)]
    lhs = jnp.concatenate(taps, axis=0) if K > 1 else taps[0]     # (K*Cin, H*W)
    return jnp.dot(w, lhs, preferred_element_type=jnp.float32)    # (Cout, H*W) f32


def convblockskip_kernel(K, dil, pad_l, pad_r, W,
                         x_ref, w1_ref, b1_ref, w2_ref, b2_ref, o_ref):
    # x_ref : (Bt, Cin, H*W)  f32   (skip add reuses this block -> single input DMA)
    # w1_ref: (Cout, K*Cin)   bf16
    # b1_ref: (Cout, 1)       f32
    # w2_ref: (Cout, K*Cout)  bf16
    # b2_ref: (Cout, 1)       f32
    # o_ref : (Bt, Cout, H*W) f32   (lane-dense stores)
    Bt = x_ref.shape[0]
    w1 = w1_ref[...]
    w2 = w2_ref[...]
    b1 = b1_ref[...]
    b2 = b2_ref[...]
    for b in range(Bt):                                  # static, unrolled
        x = x_ref[b]                                     # (Cin, H*W) f32
        h1 = _dilated_conv1d(x, w1, K, dil, pad_l, pad_r, W)
        h1 = jnp.maximum(h1 + b1, 0.0)                   # ReLU
        h2 = _dilated_conv1d(h1, w2, K, dil, pad_l, pad_r, W)
        o_ref[b] = jnp.maximum(h2 + b2 + x, 0.0).astype(o_ref.dtype)  # skip + ReLU


def _pick_batch_tile(N, Cin, Cout, HW):
    bt = max(1, N // 2)                 # keep >=2 parallel grid steps (v7x: 2 TCs)
    while N % bt:
        bt -= 1
    per_elem = (Cin + Cout) * HW * 4 * 2   # bytes, x2 for double buffering
    while bt > 1 and bt * per_elem > 8 * 1024 * 1024:
        bt = max(1, bt // 2)
        while N % bt:
            bt -= 1
    return bt


def conv_block_skip(x_nchw, w1_oihw, b1, w2_oihw, b2, dilation, batch_tile=None):
    """x_nchw: (N, C, H, W) float32 (PyTorch layout). Returns same layout."""
    N, Cin, H, W = x_nchw.shape
    Cout, Cin_w, K, kw = w1_oihw.shape
    assert Cin_w == Cin and kw == 1
    assert w2_oihw.shape == (Cout, Cout, K, 1)
    # The residual add silently requires matching channel counts -- fail loudly.
    assert Cin == Cout, "ConvBlockSkip skip-connection requires input_filters == nb_filters"

    total = dilation * (K - 1)            # PyTorch padding='same': left = total//2
    pad_l = total // 2
    pad_r = total - pad_l
    HW = H * W

    if batch_tile is None:
        batch_tile = _pick_batch_tile(N, Cin, Cout, HW)
    assert N % batch_tile == 0
    n_tiles = N // batch_tile

    # Free (contiguous) reshape: no transpose, lane axis = H*W.
    x_flat = x_nchw.reshape(N, Cin, HW).astype(jnp.float32)

    # Weights as (Cout, K*Cin) with index [co, t*Cin + ci] = w[co, ci, t, 0]; bf16 for MXU.
    w1m = jnp.transpose(w1_oihw[:, :, :, 0], (0, 2, 1)).reshape(Cout, K * Cin).astype(jnp.bfloat16)
    w2m = jnp.transpose(w2_oihw[:, :, :, 0], (0, 2, 1)).reshape(Cout, K * Cout).astype(jnp.bfloat16)
    b1r = b1.reshape(Cout, 1).astype(jnp.float32)
    b2r = b2.reshape(Cout, 1).astype(jnp.float32)

    kernel = partial(convblockskip_kernel, K, dilation, pad_l, pad_r, W)

    out_flat = pl.pallas_call(
        kernel,
        out_shape=jax.ShapeDtypeStruct((N, Cout, HW), jnp.float32),
        grid_spec=pltpu.PrefetchScalarGridSpec(
            num_scalar_prefetch=0,
            grid=(n_tiles,),                       # batch-tiled grid
            in_specs=[
                pl.BlockSpec((batch_tile, Cin, HW), lambda n: (n, 0, 0)),
                pl.BlockSpec((Cout, K * Cin), lambda n: (0, 0)),   # resident weights
                pl.BlockSpec((Cout, 1), lambda n: (0, 0)),
                pl.BlockSpec((Cout, K * Cout), lambda n: (0, 0)),
                pl.BlockSpec((Cout, 1), lambda n: (0, 0)),
            ],
            out_specs=pl.BlockSpec((batch_tile, Cout, HW), lambda n: (n, 0, 0)),
        ),
        compiler_params=pltpu.CompilerParams(
            dimension_semantics=("parallel",),
            vmem_limit_bytes=32 * 1024 * 1024,     # explicit budget (fits v7x's 64 MiB)
        ),
    )(x_flat, w1m, b1r, w2m, b2r)

    return out_flat.reshape(N, Cout, H, W)


def reference_forward(x, w1_oihw, b1, w2_oihw, b2, dilation):
    """Pure-JAX f32 reference mimicking the PyTorch module (batch_norm=False)."""
    def conv_same(x, w, b, d):
        K = w.shape[2]
        total = d * (K - 1)
        pl_, pr = total // 2, total - total // 2
        xp = jnp.pad(x, ((0, 0), (0, 0), (pl_, pr), (0, 0)))
        y = jax.lax.conv_general_dilated(
            xp, w, window_strides=(1, 1), padding="VALID",
            rhs_dilation=(d, 1),
            dimension_numbers=("NCHW", "OIHW", "NCHW"))
        return y + b.reshape(1, -1, 1, 1)

    out = jax.nn.relu(conv_same(x, w1_oihw, b1, dilation))
    out = conv_same(out, w2_oihw, b2, dilation)
    return jax.nn.relu(out + x)


if __name__ == "__main__":
    # Module config (batch_norm=False path; skip requires input_filters == nb_filters)
    window_size = 16      # H (time axis)
    filter_width = 3      # K
    input_filters = 8     # Cin
    nb_filters = 8        # Cout
    dilation = 2
    # TODO(synk): batch_norm=True path (train-mode BatchNorm2d with running stats) not implemented.

    N, W = 4, 8           # batch, sensor-channel (width) axis -> H*W = 128 (lane-dense)

    key = jax.random.PRNGKey(0)
    kx, kw1, kb1, kw2, kb2 = jax.random.split(key, 5)

    x = jax.random.normal(kx, (N, input_filters, window_size, W), jnp.float32)

    # PyTorch Conv2d weight layout: (Cout, Cin, kH=filter_width, kW=1)
    w1_oihw = 0.1 * jax.random.normal(kw1, (nb_filters, input_filters, filter_width, 1), jnp.float32)
    b1 = 0.1 * jax.random.normal(kb1, (nb_filters,), jnp.float32)
    w2_oihw = 0.1 * jax.random.normal(kw2, (nb_filters, nb_filters, filter_width, 1), jnp.float32)
    b2 = 0.1 * jax.random.normal(kb2, (nb_filters,), jnp.float32)

    out = conv_block_skip(x, w1_oihw, b1, w2_oihw, b2, dilation)
    out = jax.block_until_ready(out)

    ref = reference_forward(x, w1_oihw, b1, w2_oihw, b2, dilation)
    # bf16 MXU operands (f32 accumulation) -> slightly looser tolerance than pure f32.
    np.testing.assert_allclose(np.asarray(out), np.asarray(ref), rtol=2e-2, atol=2e-2)

    print("KERNEL_OK")
</pallas_src>

<mosaic_0001>
module attributes {stable_mosaic.version = 11 : i64} {
  func.func @convblockskip_kernel(%arg0: i32, %arg1: memref<2x8x128xf32, #tpu.memory_space<vmem>>, %arg2: memref<8x24xbf16, #tpu.memory_space<vmem>>, %arg3: memref<8x1xf32, #tpu.memory_space<vmem>>, %arg4: memref<8x24xbf16, #tpu.memory_space<vmem>>, %arg5: memref<8x1xf32, #tpu.memory_space<vmem>>, %arg6: memref<2x8x128xf32, #tpu.memory_space<vmem>>) attributes {dimension_semantics = [#tpu.dimension_semantics<parallel>], iteration_bounds = array<i64: 2>, scalar_prefetch = 0 : i64, scratch_operands = 0 : i64, tpu.core_type = #tpu.core_type<tc>, window_params = [{transform_indices = @transform_0, window_bounds = array<i64: 2, 8, 128>}, {pipeline_mode = #tpu.pipeline_mode<synchronous>, transform_indices = @transform_1, window_bounds = array<i64: 8, 24>}, {pipeline_mode = #tpu.pipeline_mode<synchronous>, transform_indices = @transform_2, window_bounds = array<i64: 8, 1>}, {pipeline_mode = #tpu.pipeline_mode<synchronous>, transform_indices = @transform_3, window_bounds = array<i64: 8, 24>}, {pipeline_mode = #tpu.pipeline_mode<synchronous>, transform_indices = @transform_4, window_bounds = array<i64: 8, 1>}, {transform_indices = @transform_5, window_bounds = array<i64: 2, 8, 128>}]} {
    %c0 = arith.constant 0 : index
    %c0_0 = arith.constant 0 : index
    %0 = vector.load %arg2[%c0, %c0_0] : memref<8x24xbf16, #tpu.memory_space<vmem>>, vector<8x24xbf16>
    %c0_1 = arith.constant 0 : index
    %c0_2 = arith.constant 0 : index
    %1 = vector.load %arg4[%c0_1, %c0_2] : memref<8x24xbf16, #tpu.memory_space<vmem>>, vector<8x24xbf16>
    %c0_3 = arith.constant 0 : index
    %c0_4 = arith.constant 0 : index
    %2 = vector.load %arg3[%c0_3, %c0_4] : memref<8x1xf32, #tpu.memory_space<vmem>>, vector<8x1xf32>
    %c0_5 = arith.constant 0 : index
    %c0_6 = arith.constant 0 : index
    %3 = vector.load %arg5[%c0_5, %c0_6] : memref<8x1xf32, #tpu.memory_space<vmem>>, vector<8x1xf32>
    %c0_7 = arith.constant 0 : index
    %c0_8 = arith.constant 0 : index
    %c0_9 = arith.constant 0 : index
    %4 = vector.load %arg1[%c0_7, %c0_8, %c0_9] : memref<2x8x128xf32, #tpu.memory_space<vmem>>, vector<1x8x128xf32>
    %5 = vector.shape_cast %4 : vector<1x8x128xf32> to vector<8x128xf32>
    %6 = arith.truncf %5 : vector<8x128xf32> to vector<8x128xbf16>
    %cst = arith.constant 0.000000e+00 : bf16
    %7 = vector.broadcast %cst : bf16 to vector<8x16xbf16>
    %cst_10 = arith.constant 0.000000e+00 : bf16
    %8 = vector.broadcast %cst_10 : bf16 to vector<8x16xbf16>
    %9 = tpu.concatenate %7, %6, %8 in 1 : vector<8x16xbf16>, vector<8x128xbf16>, vector<8x16xbf16> -> vector<8x160xbf16>
    %10 = vector.extract_strided_slice %9 {offsets = [0, 0], sizes = [8, 128], strides = [1, 1]} : vector<8x160xbf16> to vector<8x128xbf16>
    %11 = vector.extract_strided_slice %9 {offsets = [0, 16], sizes = [8, 128], strides = [1, 1]} : vector<8x160xbf16> to vector<8x128xbf16>
    %12 = vector.extract_strided_slice %9 {offsets = [0, 32], sizes = [8, 128], strides = [1, 1]} : vector<8x160xbf16> to vector<8x128xbf16>
    %13 = tpu.concatenate %10, %11, %12 in 0 : vector<8x128xbf16>, vector<8x128xbf16>, vector<8x128xbf16> -> vector<24x128xbf16>
    %cst_11 = arith.constant dense<0.000000e+00> : vector<8x128xf32>
    %14 = tpu.matmul %0, %13, %cst_11 {dimension_numbers = #tpu.dot_dimension_numbers<[1], [0], [0], [1], [0, 0, 1, 1], [], []>} : vector<8x24xbf16>, vector<24x128xbf16>, vector<8x128xf32> -> vector<8x128xf32>
    %15 = vector.broadcast %2 : vector<8x1xf32> to vector<8x128xf32>
    %16 = arith.addf %14, %15 : vector<8x128xf32>
    %cst_12 = arith.constant 0.000000e+00 : f32
    %17 = vector.broadcast %cst_12 : f32 to vector<8x128xf32>
    %18 = arith.maximumf %16, %17 : vector<8x128xf32>
    %19 = arith.truncf %18 : vector<8x128xf32> to vector<8x128xbf16>
    %cst_13 = arith.constant 0.000000e+00 : bf16
    %20 = vector.broadcast %cst_13 : bf16 to vector<8x16xbf16>
    %cst_14 = arith.constant 0.000000e+00 : bf16
    %21 = vector.broadcast %cst_14 : bf16 to vector<8x16xbf16>
    %22 = tpu.concatenate %20, %19, %21 in 1 : vector<8x16xbf16>, vector<8x128xbf16>, vector<8x16xbf16> -> vector<8x160xbf16>
    %23 = vector.extract_strided_slice %22 {offsets = [0, 0], sizes = [8, 128], strides = [1, 1]} : vector<8x160xbf16> to vector<8x128xbf16>
    %24 = vector.extract_strided_slice %22 {offsets = [0, 16], sizes = [8, 128], strides = [1, 1]} : vector<8x160xbf16> to vector<8x128xbf16>
    %25 = vector.extract_strided_slice %22 {offsets = [0, 32], sizes = [8, 128], strides = [1, 1]} : vector<8x160xbf16> to vector<8x128xbf16>
    %26 = tpu.concatenate %23, %24, %25 in 0 : vector<8x128xbf16>, vector<8x128xbf16>, vector<8x128xbf16> -> vector<24x128xbf16>
    %cst_15 = arith.constant dense<0.000000e+00> : vector<8x128xf32>
    %27 = tpu.matmul %1, %26, %cst_15 {dimension_numbers = #tpu.dot_dimension_numbers<[1], [0], [0], [1], [0, 0, 1, 1], [], []>} : vector<8x24xbf16>, vector<24x128xbf16>, vector<8x128xf32> -> vector<8x128xf32>
    %28 = vector.broadcast %3 : vector<8x1xf32> to vector<8x128xf32>
    %29 = arith.addf %27, %28 : vector<8x128xf32>
    %30 = arith.addf %29, %5 : vector<8x128xf32>
    %cst_16 = arith.constant 0.000000e+00 : f32
    %31 = vector.broadcast %cst_16 : f32 to vector<8x128xf32>
    %32 = arith.maximumf %30, %31 : vector<8x128xf32>
    %c0_17 = arith.constant 0 : index
    %c0_18 = arith.constant 0 : index
    %c0_19 = arith.constant 0 : index
    %33 = vector.load %arg6[%c0_17, %c0_18, %c0_19] : memref<2x8x128xf32, #tpu.memory_space<vmem>>, vector<1x8x128xf32>
    %34 = vector.shape_cast %33 : vector<1x8x128xf32> to vector<8x128xf32>
    %35 = vector.shape_cast %32 : vector<8x128xf32> to vector<1x8x128xf32>
    tpu.vector_store %arg6[%c0_17, %c0_18, %c0_19], %35 {strides = array<i32>} : memref<2x8x128xf32, #tpu.memory_space<vmem>>, vector<1x8x128xf32>,
    %c1 = arith.constant 1 : index
    %c0_20 = arith.constant 0 : index
    %c0_21 = arith.constant 0 : index
    %36 = vector.load %arg1[%c1, %c0_20, %c0_21] : memref<2x8x128xf32, #tpu.memory_space<vmem>>, vector<1x8x128xf32>
    %37 = vector.shape_cast %36 : vector<1x8x128xf32> to vector<8x128xf32>
    %38 = arith.truncf %37 : vector<8x128xf32> to vector<8x128xbf16>
    %cst_22 = arith.constant 0.000000e+00 : bf16
    %39 = vector.broadcast %cst_22 : bf16 to vector<8x16xbf16>
    %cst_23 = arith.constant 0.000000e+00 : bf16
    %40 = vector.broadcast %cst_23 : bf16 to vector<8x16xbf16>
    %41 = tpu.concatenate %39, %38, %40 in 1 : vector<8x16xbf16>, vector<8x128xbf16>, vector<8x16xbf16> -> vector<8x160xbf16>
    %42 = vector.extract_strided_slice %41 {offsets = [0, 0], sizes = [8, 128], strides = [1, 1]} : vector<8x160xbf16> to vector<8x128xbf16>
    %43 = vector.extract_strided_slice %41 {offsets = [0, 16], sizes = [8, 128], strides = [1, 1]} : vector<8x160xbf16> to vector<8x128xbf16>
    %44 = vector.extract_strided_slice %41 {offsets = [0, 32], sizes = [8, 128], strides = [1, 1]} : vector<8x160xbf16> to vector<8x128xbf16>
    %45 = tpu.concatenate %42, %43, %44 in 0 : vector<8x128xbf16>, vector<8x128xbf16>, vector<8x128xbf16> -> vector<24x128xbf16>
    %cst_24 = arith.constant dense<0.000000e+00> : vector<8x128xf32>
    %46 = tpu.matmul %0, %45, %cst_24 {dimension_numbers = #tpu.dot_dimension_numbers<[1], [0], [0], [1], [0, 0, 1, 1], [], []>} : vector<8x24xbf16>, vector<24x128xbf16>, vector<8x128xf32> -> vector<8x128xf32>
    %47 = vector.broadcast %2 : vector<8x1xf32> to vector<8x128xf32>
    %48 = arith.addf %46, %47 : vector<8x128xf32>
    %cst_25 = arith.constant 0.000000e+00 : f32
    %49 = vector.broadcast %cst_25 : f32 to vector<8x128xf32>
    %50 = arith.maximumf %48, %49 : vector<8x128xf32>
    %51 = arith.truncf %50 : vector<8x128xf32> to vector<8x128xbf16>
    %cst_26 = arith.constant 0.000000e+00 : bf16
    %52 = vector.broadcast %cst_26 : bf16 to vector<8x16xbf16>
    %cst_27 = arith.constant 0.000000e+00 : bf16
    %53 = vector.broadcast %cst_27 : bf16 to vector<8x16xbf16>
    %54 = tpu.concatenate %52, %51, %53 in 1 : vector<8x16xbf16>, vector<8x128xbf16>, vector<8x16xbf16> -> vector<8x160xbf16>
    %55 = vector.extract_strided_slice %54 {offsets = [0, 0], sizes = [8, 128], strides = [1, 1]} : vector<8x160xbf16> to vector<8x128xbf16>
    %56 = vector.extract_strided_slice %54 {offsets = [0, 16], sizes = [8, 128], strides = [1, 1]} : vector<8x160xbf16> to vector<8x128xbf16>
    %57 = vector.extract_strided_slice %54 {offsets = [0, 32], sizes = [8, 128], strides = [1, 1]} : vector<8x160xbf16> to vector<8x128xbf16>
    %58 = tpu.concatenate %55, %56, %57 in 0 : vector<8x128xbf16>, vector<8x128xbf16>, vector<8x128xbf16> -> vector<24x128xbf16>
    %cst_28 = arith.constant dense<0.000000e+00> : vector<8x128xf32>
    %59 = tpu.matmul %1, %58, %cst_28 {dimension_numbers = #tpu.dot_dimension_numbers<[1], [0], [0], [1], [0, 0, 1, 1], [], []>} : vector<8x24xbf16>, vector<24x128xbf16>, vector<8x128xf32> -> vector<8x128xf32>
    %60 = vector.broadcast %3 : vector<8x1xf32> to vector<8x128xf32>
    %61 = arith.addf %59, %60 : vector<8x128xf32>
    %62 = arith.addf %61, %37 : vector<8x128xf32>
    %cst_29 = arith.constant 0.000000e+00 : f32
    %63 = vector.broadcast %cst_29 : f32 to vector<8x128xf32>
    %64 = arith.maximumf %62, %63 : vector<8x128xf32>
    %c1_30 = arith.constant 1 : index
    %c0_31 = arith.constant 0 : index
    %c0_32 = arith.constant 0 : index
    %65 = vector.load %arg6[%c1_30, %c0_31, %c0_32] : memref<2x8x128xf32, #tpu.memory_space<vmem>>, vector<1x8x128xf32>
    %66 = vector.shape_cast %65 : vector<1x8x128xf32> to vector<8x128xf32>
    %67 = vector.shape_cast %64 : vector<8x128xf32> to vector<1x8x128xf32>
    tpu.vector_store %arg6[%c1_30, %c0_31, %c0_32], %67 {strides = array<i32>} : memref<2x8x128xf32, #tpu.memory_space<vmem>>, vector<1x8x128xf32>,
    return
  }
  func.func @transform_0(%arg0: i32) -> (i32, i32, i32) {
    %c0_i32 = arith.constant 0 : i32
    %c0_i32_0 = arith.constant 0 : i32
    %c0_i32_1 = arith.constant 0 : i32
    return %arg0, %c0_i32, %c0_i32_0 : i32, i32, i32
  }
  func.func @transform_1(%arg0: i32) -> (i32, i32) {
    %c0_i32 = arith.constant 0 : i32
    %c0_i32_0 = arith.constant 0 : i32
    %c0_i32_1 = arith.constant 0 : i32
    return %c0_i32, %c0_i32_0 : i32, i32
  }
  func.func @transform_2(%arg0: i32) -> (i32, i32) {
    %c0_i32 = arith.constant 0 : i32
    %c0_i32_0 = arith.constant 0 : i32
    %c0_i32_1 = arith.constant 0 : i32
    return %c0_i32, %c0_i32_0 : i32, i32
  }
  func.func @transform_3(%arg0: i32) -> (i32, i32) {
    %c0_i32 = arith.constant 0 : i32
    %c0_i32_0 = arith.constant 0 : i32
    %c0_i32_1 = arith.constant 0 : i32
    return %c0_i32, %c0_i32_0 : i32, i32
  }
  func.func @transform_4(%arg0: i32) -> (i32, i32) {
    %c0_i32 = arith.constant 0 : i32
    %c0_i32_0 = arith.constant 0 : i32
    %c0_i32_1 = arith.constant 0 : i32
    return %c0_i32, %c0_i32_0 : i32, i32
  }
  func.func @transform_5(%arg0: i32) -> (i32, i32, i32) {
    %c0_i32 = arith.constant 0 : i32
    %c0_i32_0 = arith.constant 0 : i32
    %c0_i32_1 = arith.constant 0 : i32
    return %arg0, %c0_i32, %c0_i32_0 : i32, i32, i32
  }
}

</mosaic_0001>

<llo_original>
// kernel: tpu_custom_call.1
$region0: #{tpu_custom_call.1}
  #allocation0 [shape = 'u32[]', space=smem, size = 0x4, offset = 0x4, fixed_abs, tag = 'smem constant byte address 0x4 - core index']
  #allocation1 [shape = 'u32[144,128]{1,0:T(1,128)}', space=vmem, size = 0x12000, scoped, tag = 'internal scratch']
  %s0 = inlined_call_operand.hbm [shape: f32[4,8,128], index: 0, kind: input, shape index: {}]
  %s1 = inlined_call_operand.vmem [shape: bf16[8,24], index: 1, kind: input, shape index: {}]
  %s2 = inlined_call_operand.vmem [shape: f32[8,1], index: 2, kind: input, shape index: {}]
  %s3 = inlined_call_operand.vmem [shape: bf16[8,24], index: 3, kind: input, shape index: {}]
  %s4 = inlined_call_operand.vmem [shape: f32[8,1], index: 4, kind: input, shape index: {}]
  %s5 = inlined_call_operand.hbm [shape: f32[4,8,128], index: 5, kind: output, shape index: {}]
  %s6 = sld [smem:[#allocation0]]
  $region57: #{tpu_custom_call.1} parent=0
    _
  %s8 = ssub.s32 1, %s6
  %s9 = scalar_select 0, %s8, %s6
  $region1: #{tpu_custom_call.1} parent=0
    #allocation2 [shape = 'u8[16384]{0}', space=vmem, size = 0x4000, scoped, tag = 'input window, operand 0']
    #allocation3 [shape = 's32[2]{0}', space=sflag, size = 0x8, scoped, tag = 'scoped memory for tpu_custom_call.1']
    #allocation4 [shape = 's32[2]{0}', space=sflag, size = 0x8, scoped, tag = 'scoped memory for tpu_custom_call.1']
    #allocation5 [shape = 'u8[16384]{0}', space=vmem, size = 0x4000, scoped, tag = 'output window, operand 0']
    %10 = vsyncpa [#allocation3], 0
    %s11 = scalar_lea.sflag [#allocation3], 1
    %12 = vsyncpa %s11, 0
    %13 = vsyncpa [#allocation4], 0
    %s14 = scalar_lea.sflag [#allocation4], 1
    %15 = vsyncpa %s14, 0
    loop: start=0, step=1, limit=4
    $region2: #{tpu_custom_call.1} parent=1 // loop_pre_header
      _
    $region3: #{tpu_custom_call.1} parent=1 // loop_header
      %s17 = sphi 0, %s21
      %p18 = scmp.ge.s32.totalorder %s17, 4
      %s27 = sphi 0, %s29
      %s30 = sphi 0, %s27
      %s31 = sphi 0, %s30
      %s47 = sphi 0, %s31
      %s51 = sphi 0, %s51
      %s53 = sphi 0, %s51
      %s54 = sphi 0, %s53
      %s68 = sphi 0, %s54
      %s72 = sphi 0, %s72
      %s74 = sphi 0, %s72
      %s75 = sphi 0, %s74
      %s89 = sphi 0, %s75
      %s93 = sphi 0, %s93
      %s95 = sphi 0, %s93
      %s96 = sphi 0, %s95
      %s110 = sphi 0, %s96
      %s114 = sphi 0, %s114
      %s116 = sphi 0, %s114
      %s117 = sphi 0, %s116
      %s131 = sphi 0, %s117
      %s137 = sphi 0, %s139
      %s140 = sphi 0, %s137
      %s141 = sphi 0, %s140
      %s157 = sphi 0, %s141
    $region4: #{tpu_custom_call.1} parent=1 // loop_header_branch
      %20 = sbr.rel (%p18) target = $region8
    $region5: #{tpu_custom_call.1} parent=1 // loop_body
      %s22 = ssub.s32 %s17, 1
      %s23 = ssub.s32 %s17, 2
      %s24 = sadd.s32 %s17, 1
      %s25 = ssub.s32 %s17, %s24
      %p26 = scmp.eq.s32.totalorder %s25, 0
      %s28 = sadd.s32 %s27, 1
      %s29 = scalar_select %p26, %s27, %s28
      %p32 = pneg %p26
      %p33 = scmp.eq.s32.totalorder %s17, 1
      %p34 = por %p32, %p33
      %p35 = scmp.ne.s32.totalorder %s27, %s30
      %p36 = scmp.eq.s32.totalorder %s17, 0
      %p37 = por %p35, %p36
      %p38 = scmp.ne.s32.totalorder %s27, %s30
      %p39 = scmp.eq.s32.totalorder %s22, 1
      %p40 = por %p38, %p39
      %p41 = scmp.ne.s32.totalorder %s30, %s31
      %p42 = scmp.eq.s32.totalorder %s22, 0
      %p43 = por %p41, %p42
      %p44 = scmp.ne.s32.totalorder %s30, %s31
      %p45 = scmp.eq.s32.totalorder %s23, 1
      %p46 = por %p44, %p45
      %p48 = scmp.ne.s32.totalorder %s31, %s47
      %p49 = scmp.eq.s32.totalorder %s23, 0
      %p50 = por %p48, %p49
      %s52 = sadd.s32 %s51, 1
      %p55 = scmp.eq.s32.totalorder %s17, 1
      %p56 = scmp.ne.s32.totalorder %s51, %s53
      %p57 = scmp.eq.s32.totalorder %s17, 0
      %p58 = por %p56, %p57
      %p59 = scmp.ne.s32.totalorder %s51, %s53
      %p60 = scmp.eq.s32.totalorder %s22, 1
      %p61 = por %p59, %p60
      %p62 = scmp.ne.s32.totalorder %s53, %s54
      %p63 = scmp.eq.s32.totalorder %s22, 0
      %p64 = por %p62, %p63
      %p65 = scmp.ne.s32.totalorder %s53, %s54
      %p66 = scmp.eq.s32.totalorder %s23, 1
      %p67 = por %p65, %p66
      %p69 = scmp.ne.s32.totalorder %s54, %s68
      %p70 = scmp.eq.s32.totalorder %s23, 0
      %p71 = por %p69, %p70
      %s73 = sadd.s32 %s72, 1
      %p76 = scmp.eq.s32.totalorder %s17, 1
      %p77 = scmp.ne.s32.totalorder %s72, %s74
      %p78 = scmp.eq.s32.totalorder %s17, 0
      %p79 = por %p77, %p78
      %p80 = scmp.ne.s32.totalorder %s72, %s74
      %p81 = scmp.eq.s32.totalorder %s22, 1
      %p82 = por %p80, %p81
      %p83 = scmp.ne.s32.totalorder %s74, %s75
      %p84 = scmp.eq.s32.totalorder %s22, 0
      %p85 = por %p83, %p84
      %p86 = scmp.ne.s32.totalorder %s74, %s75
      %p87 = scmp.eq.s32.totalorder %s23, 1
      %p88 = por %p86, %p87
      %p90 = scmp.ne.s32.totalorder %s75, %s89
      %p91 = scmp.eq.s32.totalorder %s23, 0
      %p92 = por %p90, %p91
      %s94 = sadd.s32 %s93, 1
      %p97 = scmp.eq.s32.totalorder %s17, 1
      %p98 = scmp.ne.s32.totalorder %s93, %s95
      %p99 = scmp.eq.s32.totalorder %s17, 0
      %p100 = por %p98, %p99
      %p101 = scmp.ne.s32.totalorder %s93, %s95
      %p102 = scmp.eq.s32.totalorder %s22, 1
      %p103 = por %p101, %p102
      %p104 = scmp.ne.s32.totalorder %s95, %s96
      %p105 = scmp.eq.s32.totalorder %s22, 0
      %p106 = por %p104, %p105
      %p107 = scmp.ne.s32.totalorder %s95, %s96
      %p108 = scmp.eq.s32.totalorder %s23, 1
      %p109 = por %p107, %p108
      %p111 = scmp.ne.s32.totalorder %s96, %s110
      %p112 = scmp.eq.s32.totalorder %s23, 0
      %p113 = por %p111, %p112
      %s115 = sadd.s32 %s114, 1
      %p118 = scmp.eq.s32.totalorder %s17, 1
      %p119 = scmp.ne.s32.totalorder %s114, %s116
      %p120 = scmp.eq.s32.totalorder %s17, 0
      %p121 = por %p119, %p120
      %p122 = scmp.ne.s32.totalorder %s114, %s116
      %p123 = scmp.eq.s32.totalorder %s22, 1
      %p124 = por %p122, %p123
      %p125 = scmp.ne.s32.totalorder %s116, %s117
      %p126 = scmp.eq.s32.totalorder %s22, 0
      %p127 = por %p125, %p126
      %p128 = scmp.ne.s32.totalorder %s116, %s117
      %p129 = scmp.eq.s32.totalorder %s23, 1
      %p130 = por %p128, %p129
      %p132 = scmp.ne.s32.totalorder %s117, %s131
      %p133 = scmp.eq.s32.totalorder %s23, 0
      %p134 = por %p132, %p133
      %s135 = ssub.s32 %s17, %s24
      %p136 = scmp.eq.s32.totalorder %s135, 0
      %s138 = sadd.s32 %s137, 1
      %s139 = scalar_select %p136, %s137, %s138
      %p142 = pneg %p136
      %p143 = scmp.eq.s32.totalorder %s17, 1
      %p144 = por %p142, %p143
      %p145 = scmp.ne.s32.totalorder %s137, %s140
      %p146 = scmp.eq.s32.totalorder %s17, 0
      %p147 = por %p145, %p146
      %p148 = scmp.ne.s32.totalorder %s137, %s140
      %p149 = scmp.eq.s32.totalorder %s22, 1
      %p150 = por %p148, %p149
      %p151 = scmp.ne.s32.totalorder %s140, %s141
      %p152 = scmp.eq.s32.totalorder %s22, 0
      %p153 = por %p151, %p152
      %p154 = scmp.ne.s32.totalorder %s140, %s141
      %p155 = scmp.eq.s32.totalorder %s23, 1
      %p156 = por %p154, %p155
      %p158 = scmp.ne.s32.totalorder %s141, %s157
      %p159 = scmp.eq.s32.totalorder %s23, 0
      %p160 = por %p158, %p159
      %p161 = scmp.le.s32.totalorder 1, %s17
      %p162 = scmp.lt.s32.totalorder %s17, 3
      %p163 = pnand %p161, %p162
      %p164 = pneg %p163
      // Predicated region
      $region9: #{tpu_custom_call.1} parent=5 // pred_check
        _
      $region10: #{tpu_custom_call.1} parent=5 // pred_check_branch
        %166 = sbr.rel (%p163) target = $region12
      $region11: #{tpu_custom_call.1} parent=5 // pred_region
        %s167 = ssub.s32 %s17, 1
        // Predicated region
        $region13: #{tpu_custom_call.1} parent=11 // pred_check
          %p168 = pneg %p64
        $region14: #{tpu_custom_call.1} parent=11 // pred_check_branch
          %170 = sbr.rel (%p168) target = $region16
        $region15: #{tpu_custom_call.1} parent=11 // pred_region
          _
        $region16: #{tpu_custom_call.1} parent=11 // pred_fallthru
          _
        // Predicated region
        $region17: #{tpu_custom_call.1} parent=11 // pred_check
          %p171 = pneg %p85
        $region18: #{tpu_custom_call.1} parent=11 // pred_check_branch
          %173 = sbr.rel (%p171) target = $region20
        $region19: #{tpu_custom_call.1} parent=11 // pred_region
          _
        $region20: #{tpu_custom_call.1} parent=11 // pred_fallthru
          _
        // Predicated region
        $region21: #{tpu_custom_call.1} parent=11 // pred_check
          %p174 = pneg %p106
        $region22: #{tpu_custom_call.1} parent=11 // pred_check_branch
          %176 = sbr.rel (%p174) target = $region24
        $region23: #{tpu_custom_call.1} parent=11 // pred_region
          _
        $region24: #{tpu_custom_call.1} parent=11 // pred_fallthru
          _
        // Predicated region
        $region25: #{tpu_custom_call.1} parent=11 // pred_check
          %p177 = pneg %p127
        $region26: #{tpu_custom_call.1} parent=11 // pred_check_branch
          %179 = sbr.rel (%p177) target = $region28
        $region27: #{tpu_custom_call.1} parent=11 // pred_region
          _
        $region28: #{tpu_custom_call.1} parent=11 // pred_fallthru
          _
      $region12: #{tpu_custom_call.1} parent=5 // pred_fallthru
        _
      %p180 = scmp.lt.s32.totalorder %s17, 2
      // Predicated region
      $region29: #{tpu_custom_call.1} parent=5 // pred_check
        %p181 = pneg %p180
      $region30: #{tpu_custom_call.1} parent=5 // pred_check_branch
        %183 = sbr.rel (%p181) target = $region32
      $region31: #{tpu_custom_call.1} parent=5 // pred_region
        // Predicated region
        $region33: #{tpu_custom_call.1} parent=31 // pred_check
          %p184 = pneg %p37
        $region34: #{tpu_custom_call.1} parent=31 // pred_check_branch
          %186 = sbr.rel (%p184) target = $region36
        $region35: #{tpu_custom_call.1} parent=31 // pred_region
          %s187 = sand.u32 %s27, 1
          %s188 = scalar_lea.sflag [#allocation3], %s187
          %s189 = sand.u32 %s27, 1
          %s190 = smul.addr %s189, 16
          %s191 = scalar_lea.vmem [#allocation2], %s190
          %s192 = smul.u32 2, %s17
          %s194 = ssub.s32 256, 256
          %195 = vsyncadd %s188, %s194
          %s196 = smul.addr %s192, 128
          %s197 = scalar_lea.hbm %s0, %s196
          %s198 = sshll.u32 %s191, 4
          %s199 = int_to_ptr.vmem [resolvable:$true] %s198
          %204 = dma.hbm_to_vmem [thread:$0]  %s197, 256, %s199, %s188, 128, 128, 8
        $region36: #{tpu_custom_call.1} parent=31 // pred_fallthru
          _
      $region32: #{tpu_custom_call.1} parent=5 // pred_fallthru
        _
      %p205 = scmp.le.s32.totalorder 1, %s17
      %p206 = scmp.lt.s32.totalorder %s17, 3
      %p207 = pnand %p205, %p206
      %p208 = pneg %p207
      // Predicated region
      $region37: #{tpu_custom_call.1} parent=5 // pred_check
        _
      $region38: #{tpu_custom_call.1} parent=5 // pred_check_branch
        %210 = sbr.rel (%p207) target = $region40
      $region39: #{tpu_custom_call.1} parent=5 // pred_region
        %s211 = ssub.s32 %s17, 1
        %s212 = sand.u32 %s30, 1
        %s213 = scalar_lea.sflag [#allocation3], %s212
        %s214 = sand.u32 %s30, 1
        %s215 = smul.addr %s214, 16
        %s216 = scalar_lea.vmem [#allocation2], %s215
        // Predicated region
        $region41: #{tpu_custom_call.1} parent=39 // pred_check
          %p217 = pneg %p43
        $region42: #{tpu_custom_call.1} parent=39 // pred_check_branch
          %219 = sbr.rel (%p217) target = $region44
        $region43: #{tpu_custom_call.1} parent=39 // pred_region
          %220 = dma.done %s213, 256
        $region44: #{tpu_custom_call.1} parent=39 // pred_fallthru
          _
        %s221 = sand.u32 %s30, 1
        %s222 = scalar_lea.sflag [#allocation3], %s221
        %s223 = sand.u32 %s30, 1
        %s224 = smul.addr %s223, 16
        %s225 = scalar_lea.vmem [#allocation2], %s224
        %p226 = pneg %p43
        %p227 = pneg %p40
        %p228 = pneg %p64
        %p229 = pneg %p61
        %p230 = pneg %p85
        %p231 = pneg %p82
        %p232 = pneg %p106
        %p233 = pneg %p103
        %p234 = pneg %p127
        %p235 = pneg %p124
        %p236 = pneg %p153
        %p237 = pneg %p150
        %s238 = sand.u32 %s140, 1
        %s239 = scalar_lea.sflag [#allocation4], %s238
        %s240 = sand.u32 %s140, 1
        %s241 = smul.addr %s240, 16
        %s242 = scalar_lea.vmem [#allocation5], %s241
        %s243 = smul.u32 2, %s22
        %s244 = smul.u32 2, %s22
        %v246 = vld [vmem:[%s1] sm:$0xf]
        %v247 = vld [vmem:[%s3] sm:$0xf]
        %v248 = vld [vmem:[%s2] sm:$0xff]
        %v249 = vld [vmem:[%s4] sm:$0xff]
        %v250 = vld [vmem:[%s216] sm:$0xff]
        %v251 = vpack.c.bf16 %v250, %v250
        %253 = vrot.lane.b32.xlu0 %v251, 16
        %v254 = vpop.permute.xlu0 %253
        %vm255 = vcmask 130048
        %v258 = vsel %vm255, 0, %v254
        %v259 = vsel %vm255, %v254, 0
        %v262 = vrot.slane %v258, 4
        %v263 = vrot.slane %v259, 4
        %264 = vrot.lane.b32.xlu0 %v262, 112
        %v265 = vpop.permute.xlu0 %264
        %266 = vrot.lane.b32.xlu0 %v263, 112
        %v267 = vpop.permute.xlu0 %266
        %vm268 = vcmask 916480
        %v269 = vsel %vm268, %v265, %v267
        %270 = vrot.lane.b32.xlu0 %v258, 96
        %v271 = vpop.permute.xlu0 %270
        %272 = vrot.lane.b32.xlu0 %v259, 96
        %v273 = vpop.permute.xlu0 %272
        %vm274 = vcmask 785408
        %v275 = vsel %vm274, %v271, %v273
        %vm276 = vcmask 1043456
        %v278 = vsel %vm276, %v258, %v269
        %281 = vset.pattern.permute.xlu0 0
        %282 = vperm.xlu0 %281, %v248
        %v283 = vpop.permute.xlu0 %282
        %vm285 = vcmask 195584
        %v287 = vsel %vm285, %v246, 0
        %v290 = vsel %vm276, %v275, 0
        %292 = vmatprep.subr.bf16.mxu0 0
        %293 = vmatpush1.bf16.msra.mxu0 %v278
        %294 = vmatprep.subr.bf16.mxu0 0
        %295 = vmatpush1.bf16.msra.mxu0 %v290
        %296 = vmatprep.subr.bf16.mxu0 0
        %297 = vmatpush1.bf16.msra.mxu0 0
        %298 = vmatprep.subr.bf16.mxu0 0
        %299 = vmatpush1.bf16.msra.mxu0 0
        %300 = vmatprep.subr.bf16.mxu0 0
        %301 = vmatpush1.bf16.msra.mxu0 0
        %302 = vmatprep.subr.bf16.mxu0 0
        %303 = vmatpush1.bf16.msra.mxu0 0
        %304 = vmatprep.subr.bf16.mxu0 0
        %305 = vmatpush1.bf16.msra.mxu0 0
        %306 = vmatprep.subr.bf16.mxu0 0
        %307 = vmatpush1.bf16.msra.mxu0 0
        %308 = vmatprep.subr.bf16.mxu0 0
        %309 = vmatpush1.bf16.msra.mxu0 0
        %310 = vmatprep.subr.bf16.mxu0 0
        %311 = vmatpush1.bf16.msra.mxu0 0
        %312 = vmatprep.subr.bf16.mxu0 0
        %313 = vmatpush1.bf16.msra.mxu0 0
        %314 = vmatprep.subr.bf16.mxu0 0
        %315 = vmatpush1.bf16.msra.mxu0 0
        %316 = vmatprep.subr.bf16.mxu0 0
        %317 = vmatpush1.bf16.msra.mxu0 0
        %318 = vmatprep.subr.bf16.mxu0 0
        %319 = vmatpush1.bf16.msra.mxu0 0
        %320 = vmatprep.subr.bf16.mxu0 0
        %321 = vmatpush1.bf16.msra.mxu0 0
        %322 = vmatprep.subr.bf16.mxu0 0
        %323 = vmatpush1.bf16.msra.mxu0 0
        %324 = vmatprep.mubr.bf16.mxu0 0
        %325 = vmatmul.mubr.bf16.gmra.mrb[0].mxu0 %v287
        %v326 = vpop.f32.mrb[0].mxu0
        %v327 = vadd.f32 %v283, %v326
        %v328 = vpop.f32.mrb[0].mxu0
        %v329 = vpop.f32.mrb[0].mxu0
        %v330 = vpop.f32.mrb[0].mxu0
        %331 = vdwg.mxu0
        %v332 = vmax.f32 %v327, 0.0
        %v333 = vpack.c.bf16 %v332, %v332
        %335 = vrot.lane.b32.xlu0 %v333, 16
        %v336 = vpop.permute.xlu0 %335
        %v338 = vsel %vm255, 0, %v336
        %v339 = vsel %vm255, %v336, 0
        %v342 = vrot.slane %v338, 4
        %v343 = vrot.slane %v339, 4
        %344 = vrot.lane.b32.xlu0 %v342, 112
        %v345 = vpop.permute.xlu0 %344
        %346 = vrot.lane.b32.xlu0 %v343, 112
        %v347 = vpop.permute.xlu0 %346
        %v348 = vsel %vm268, %v345, %v347
        %349 = vrot.lane.b32.xlu0 %v338, 96
        %v350 = vpop.permute.xlu0 %349
        %351 = vrot.lane.b32.xlu0 %v339, 96
        %v352 = vpop.permute.xlu0 %351
        %v353 = vsel %vm274, %v350, %v352
        %v355 = vsel %vm276, %v338, %v348
        %358 = vset.pattern.permute.xlu0 0
        %359 = vperm.xlu0 %358, %v249
        %v360 = vpop.permute.xlu0 %359
        %v363 = vsel %vm285, %v247, 0
        %v366 = vsel %vm276, %v353, 0
        %368 = vmatprep.subr.bf16.mxu0 0
        %369 = vmatpush1.bf16.msra.mxu0 %v355
        %370 = vmatprep.subr.bf16.mxu0 0
        %371 = vmatpush1.bf16.msra.mxu0 %v366
        %372 = vmatprep.subr.bf16.mxu0 0
        %373 = vmatpush1.bf16.msra.mxu0 0
        %374 = vmatprep.subr.bf16.mxu0 0
        %375 = vmatpush1.bf16.msra.mxu0 0
        %376 = vmatprep.subr.bf16.mxu0 0
        %377 = vmatpush1.bf16.msra.mxu0 0
        %378 = vmatprep.subr.bf16.mxu0 0
        %379 = vmatpush1.bf16.msra.mxu0 0
        %380 = vmatprep.subr.bf16.mxu0 0
        %381 = vmatpush1.bf16.msra.mxu0 0
        %382 = vmatprep.subr.bf16.mxu0 0
        %383 = vmatpush1.bf16.msra.mxu0 0
        %384 = vmatprep.subr.bf16.mxu0 0
        %385 = vmatpush1.bf16.msra.mxu0 0
        %386 = vmatprep.subr.bf16.mxu0 0
        %387 = vmatpush1.bf16.msra.mxu0 0
        %388 = vmatprep.subr.bf16.mxu0 0
        %389 = vmatpush1.bf16.msra.mxu0 0
        %390 = vmatprep.subr.bf16.mxu0 0
        %391 = vmatpush1.bf16.msra.mxu0 0
        %392 = vmatprep.subr.bf16.mxu0 0
        %393 = vmatpush1.bf16.msra.mxu0 0
        %394 = vmatprep.subr.bf16.mxu0 0
        %395 = vmatpush1.bf16.msra.mxu0 0
        %396 = vmatprep.subr.bf16.mxu0 0
        %397 = vmatpush1.bf16.msra.mxu0 0
        %398 = vmatprep.subr.bf16.mxu0 0
        %399 = vmatpush1.bf16.msra.mxu0 0
        %400 = vmatprep.mubr.bf16.mxu0 0
        %401 = vmatmul.mubr.bf16.gmra.mrb[0].mxu0 %v363
        %v402 = vpop.f32.mrb[0].mxu0
        %v403 = vadd.f32 %v360, %v402
        %v404 = vpop.f32.mrb[0].mxu0
        %v405 = vpop.f32.mrb[0].mxu0
        %v406 = vpop.f32.mrb[0].mxu0
        %407 = vdwg.mxu0
        %v408 = vadd.f32 %v403, %v250
        %v409 = vmax.f32 %v408, 0.0
        %410 = vst [vmem:[%s242] sm:$0xff] %v409
        %s411 = scalar_lea.vmem %s216, 8 [#allocation2]
        %v412 = vld [vmem:[%s411] sm:$0xff]
        %v413 = vpack.c.bf16 %v412, %v412
        %415 = vrot.lane.b32.xlu0 %v413, 16
        %v416 = vpop.permute.xlu0 %415
        %v418 = vsel %vm255, 0, %v416
        %v419 = vsel %vm255, %v416, 0
        %v422 = vrot.slane %v418, 4
        %v423 = vrot.slane %v419, 4
        %424 = vrot.lane.b32.xlu0 %v422, 112
        %v425 = vpop.permute.xlu0 %424
        %426 = vrot.lane.b32.xlu0 %v423, 112
        %v427 = vpop.permute.xlu0 %426
        %v428 = vsel %vm268, %v425, %v427
        %429 = vrot.lane.b32.xlu0 %v418, 96
        %v430 = vpop.permute.xlu0 %429
        %431 = vrot.lane.b32.xlu0 %v419, 96
        %v432 = vpop.permute.xlu0 %431
        %v433 = vsel %vm274, %v430, %v432
        %v435 = vsel %vm276, %v418, %v428
        %v438 = vsel %vm276, %v433, 0
        %440 = vmatprep.subr.bf16.mxu0 0
        %441 = vmatpush1.bf16.msra.mxu0 %v435
        %442 = vmatprep.subr.bf16.mxu0 0
        %443 = vmatpush1.bf16.msra.mxu0 %v438
        %444 = vmatprep.subr.bf16.mxu0 0
        %445 = vmatpush1.bf16.msra.mxu0 0
        %446 = vmatprep.subr.bf16.mxu0 0
        %447 = vmatpush1.bf16.msra.mxu0 0
        %448 = vmatprep.subr.bf16.mxu0 0
        %449 = vmatpush1.bf16.msra.mxu0 0
        %450 = vmatprep.subr.bf16.mxu0 0
        %451 = vmatpush1.bf16.msra.mxu0 0
        %452 = vmatprep.subr.bf16.mxu0 0
        %453 = vmatpush1.bf16.msra.mxu0 0
        %454 = vmatprep.subr.bf16.mxu0 0
        %455 = vmatpush1.bf16.msra.mxu0 0
        %456 = vmatprep.subr.bf16.mxu0 0
        %457 = vmatpush1.bf16.msra.mxu0 0
        %458 = vmatprep.subr.bf16.mxu0 0
        %459 = vmatpush1.bf16.msra.mxu0 0
        %460 = vmatprep.subr.bf16.mxu0 0
        %461 = vmatpush1.bf16.msra.mxu0 0
        %462 = vmatprep.subr.bf16.mxu0 0
        %463 = vmatpush1.bf16.msra.mxu0 0
        %464 = vmatprep.subr.bf16.mxu0 0
        %465 = vmatpush1.bf16.msra.mxu0 0
        %466 = vmatprep.subr.bf16.mxu0 0
        %467 = vmatpush1.bf16.msra.mxu0 0
        %468 = vmatprep.subr.bf16.mxu0 0
        %469 = vmatpush1.bf16.msra.mxu0 0
        %470 = vmatprep.subr.bf16.mxu0 0
        %471 = vmatpush1.bf16.msra.mxu0 0
        %472 = vmatprep.mubr.bf16.mxu0 0
        %473 = vmatmul.mubr.bf16.gmra.mrb[0].mxu0 %v287
        %v474 = vpop.f32.mrb[0].mxu0
        %v475 = vadd.f32 %v283, %v474
        %v476 = vpop.f32.mrb[0].mxu0
        %v477 = vpop.f32.mrb[0].mxu0
        %v478 = vpop.f32.mrb[0].mxu0
        %479 = vdwg.mxu0
        %v480 = vmax.f32 %v475, 0.0
        %v481 = vpack.c.bf16 %v480, %v480
        %483 = vrot.lane.b32.xlu0 %v481, 16
        %v484 = vpop.permute.xlu0 %483
        %v486 = vsel %vm255, 0, %v484
        %v487 = vsel %vm255, %v484, 0
        %v490 = vrot.slane %v486, 4
        %v491 = vrot.slane %v487, 4
        %492 = vrot.lane.b32.xlu0 %v490, 112
        %v493 = vpop.permute.xlu0 %492
        %494 = vrot.lane.b32.xlu0 %v491, 112
        %v495 = vpop.permute.xlu0 %494
        %v496 = vsel %vm268, %v493, %v495
        %497 = vrot.lane.b32.xlu0 %v486, 96
        %v498 = vpop.permute.xlu0 %497
        %499 = vrot.lane.b32.xlu0 %v487, 96
        %v500 = vpop.permute.xlu0 %499
        %v501 = vsel %vm274, %v498, %v500
        %v503 = vsel %vm276, %v486, %v496
        %v506 = vsel %vm276, %v501, 0
        %508 = vmatprep.subr.bf16.mxu0 0
        %509 = vmatpush1.bf16.msra.mxu0 %v503
        %510 = vmatprep.subr.bf16.mxu0 0
        %511 = vmatpush1.bf16.msra.mxu0 %v506
        %512 = vmatprep.subr.bf16.mxu0 0
        %513 = vmatpush1.bf16.msra.mxu0 0
        %514 = vmatprep.subr.bf16.mxu0 0
        %515 = vmatpush1.bf16.msra.mxu0 0
        %516 = vmatprep.subr.bf16.mxu0 0
        %517 = vmatpush1.bf16.msra.mxu0 0
        %518 = vmatprep.subr.bf16.mxu0 0
        %519 = vmatpush1.bf16.msra.mxu0 0
        %520 = vmatprep.subr.bf16.mxu0 0
        %521 = vmatpush1.bf16.msra.mxu0 0
        %522 = vmatprep.subr.bf16.mxu0 0
        %523 = vmatpush1.bf16.msra.mxu0 0
        %524 = vmatprep.subr.bf16.mxu0 0
        %525 = vmatpush1.bf16.msra.mxu0 0
        %526 = vmatprep.subr.bf16.mxu0 0
        %527 = vmatpush1.bf16.msra.mxu0 0
        %528 = vmatprep.subr.bf16.mxu0 0
        %529 = vmatpush1.bf16.msra.mxu0 0
        %530 = vmatprep.subr.bf16.mxu0 0
        %531 = vmatpush1.bf16.msra.mxu0 0
        %532 = vmatprep.subr.bf16.mxu0 0
        %533 = vmatpush1.bf16.msra.mxu0 0
        %534 = vmatprep.subr.bf16.mxu0 0
        %535 = vmatpush1.bf16.msra.mxu0 0
        %536 = vmatprep.subr.bf16.mxu0 0
        %537 = vmatpush1.bf16.msra.mxu0 0
        %538 = vmatprep.subr.bf16.mxu0 0
        %539 = vmatpush1.bf16.msra.mxu0 0
        %540 = vmatprep.mubr.bf16.mxu0 0
        %541 = vmatmul.mubr.bf16.gmra.mrb[0].mxu0 %v363
        %v542 = vpop.f32.mrb[0].mxu0
        %v543 = vadd.f32 %v360, %v542
        %v544 = vpop.f32.mrb[0].mxu0
        %v545 = vpop.f32.mrb[0].mxu0
        %v546 = vpop.f32.mrb[0].mxu0
        %547 = vdwg.mxu0
        %v548 = vadd.f32 %v543, %v412
        %v549 = vmax.f32 %v548, 0.0
        %s550 = scalar_lea.vmem %s242, 8 [#allocation5]
        %551 = vst [vmem:[%s550] sm:$0xff] %v549
        %s552 = sand.u32 %s140, 1
        %s553 = scalar_lea.sflag [#allocation4], %s552
        %s554 = sand.u32 %s140, 1
        %s555 = smul.addr %s554, 16
        %s556 = scalar_lea.vmem [#allocation5], %s555
        // Predicated region
        $region45: #{tpu_custom_call.1} parent=39 // pred_check
          %p557 = pneg %p150
        $region46: #{tpu_custom_call.1} parent=39 // pred_check_branch
          %559 = sbr.rel (%p557) target = $region48
        $region47: #{tpu_custom_call.1} parent=39 // pred_region
          %s560 = smul.u32 2, %s22
          %s562 = ssub.s32 256, 256
          %563 = vsyncadd %s553, %s562
          %s564 = smul.addr %s560, 128
          %s565 = scalar_lea.hbm %s5, %s564
          %s566 = sshll.u32 %s556, 4
          %s567 = int_to_ptr.vmem [resolvable:$true] %s566
          %572 = dma.vmem_to_hbm [thread:$0]  %s567, 256, %s565, %s553, 128, 128, 8
        $region48: #{tpu_custom_call.1} parent=39 // pred_fallthru
          _
      $region40: #{tpu_custom_call.1} parent=5 // pred_fallthru
        _
      %p573 = scmp.le.s32.totalorder 2, %s17
      // Predicated region
      $region49: #{tpu_custom_call.1} parent=5 // pred_check
        %p574 = pneg %p573
      $region50: #{tpu_custom_call.1} parent=5 // pred_check_branch
        %576 = sbr.rel (%p574) target = $region52
      $region51: #{tpu_custom_call.1} parent=5 // pred_region
        %s577 = ssub.s32 %s17, 2
        // Predicated region
        $region53: #{tpu_custom_call.1} parent=51 // pred_check
          %p578 = pneg %p156
        $region54: #{tpu_custom_call.1} parent=51 // pred_check_branch
          %580 = sbr.rel (%p578) target = $region56
        $region55: #{tpu_custom_call.1} parent=51 // pred_region
          %s581 = sand.u32 %s141, 1
          %s582 = scalar_lea.sflag [#allocation4], %s581
          %s583 = sand.u32 %s141, 1
          %s584 = smul.addr %s583, 16
          %s585 = scalar_lea.vmem [#allocation5], %s584
          %586 = dma.done %s582, 256
        $region56: #{tpu_custom_call.1} parent=51 // pred_fallthru
          _
      $region52: #{tpu_custom_call.1} parent=5 // pred_fallthru
        _
    $region6: #{tpu_custom_call.1} parent=1 // loop_footer
      %s21 = sadd.s32 1, %s17
    $region7: #{tpu_custom_call.1} parent=1 // loop_footer_branch
      %16 = sbr.rel target = $region3
    $region8: #{tpu_custom_call.1} parent=1 // loop_exit
      _
    %587 = vsyncpa [#allocation3], 1
    %s588 = scalar_lea.sflag [#allocation3], 1
    %589 = vsyncpa %s588, 1
    %590 = vsyncpa [#allocation4], 1
    %s591 = scalar_lea.sflag [#allocation4], 1
    %592 = vsyncpa %s591, 1

</llo_original>
